<compile_context>
chip_gen: v7x
topology: tpu7x:2x2x1
jax: 0.10.0
libtpu: 0.0.40
codegen_flags: <defaults>
</compile_context>

<pallas_src>
import functools

import jax
import jax.numpy as jnp
from jax.experimental import pallas as pl
from jax.experimental.pallas import tpu as pltpu

# ~2 MiB blocks: per-step pipeline overhead (~0.35us) is negligible at this
# size (measured 512-wide f32 tiles already hit ~85% of HBM roofline), while
# leaving plenty of VMEM headroom even for bf16 inputs that get upcast to f32
# inside the kernel (center kernel worst case ~16 MiB live < 32 MiB scoped).
_TARGET_BLOCK_BYTES = 2 * 1024 * 1024
_VMEM_LIMIT_BYTES = 32 * 1024 * 1024  # raises v5e's 16 MiB default; safe on v7x


def _pick_lane_tile(hw, c, itemsize, target_bytes):
    """Largest lane tile that divides hw, is a multiple of 128 (or the full,
    possibly ragged, extent) and keeps a (1, c, tile) block under budget."""
    if hw % 128 != 0:
        return hw  # must take the full lane extent (BlockSpec (8,128) rule)
    budget_lanes = max(128, (target_bytes // max(1, c * itemsize)) // 128 * 128)
    if hw <= budget_lanes:
        return hw
    t = budget_lanes
    while t > 128 and hw % t != 0:
        t -= 128
    return t


def _pick_batch_tile(n, block_bytes, target_bytes):
    """Largest leading-dim tile dividing n whose block fits the byte budget."""
    t = max(1, min(n, target_bytes // max(1, block_bytes)))
    while n % t != 0:
        t -= 1
    return t


def _pick_batch_tile_2d(n, row_bytes, target_bytes):
    """Sublane tile for the 2D (N, C) path: must divide N and be a multiple of
    8 or the full extent.  Returns None if no valid tile exists (caller falls
    back to the generic 3D path)."""
    if n * row_bytes <= target_bytes:
        return n
    budget = max(8, target_bytes // max(1, row_bytes))
    t = (budget // 8) * 8
    while t >= 8:
        if n % t == 0:
            return t
        t -= 8
    return None


# ----------------------------------------------------------------------------
# Kernel 1 (generic path): per-channel partial sums.
#   grid = (N // tn, HW // t_hw); x block (tn, C, t_hw); output block (1, C, 1)
#   per batch tile (leading axis "parallel"), accumulated across the lane-axis
#   tiles ("arbitrary" trailing axis).  Lane reduce uses the XLU.
# ----------------------------------------------------------------------------
def _channel_sum_kernel(x_ref, sum_ref):
    @pl.when(pl.program_id(1) == 0)
    def _():
        sum_ref[...] = jnp.zeros_like(sum_ref)

    sum_ref[...] += jnp.sum(x_ref[...].astype(jnp.float32), axis=(0, 2),
                            keepdims=True)


def _channel_sum(x3d, tn, t_hw):
    N, C, HW = x3d.shape
    return pl.pallas_call(
        _channel_sum_kernel,
        out_shape=jax.ShapeDtypeStruct((N // tn, C, 1), jnp.float32),
        grid_spec=pltpu.PrefetchScalarGridSpec(
            num_scalar_prefetch=0,
            grid=(N // tn, HW // t_hw),
            in_specs=[pl.BlockSpec((tn, C, t_hw), lambda i, h: (i, 0, h))],
            out_specs=pl.BlockSpec((1, C, 1), lambda i, h: (i, 0, 0)),
        ),
        compiler_params=pltpu.CompilerParams(
            dimension_semantics=("parallel", "arbitrary"),
            vmem_limit_bytes=_VMEM_LIMIT_BYTES),
    )(x3d)


# ----------------------------------------------------------------------------
# Kernel 2 (generic path): y = x - shift,  shift = mean - bias  as (1, C, 1)
# ----------------------------------------------------------------------------
def _center_kernel(x_ref, shift_ref, o_ref):
    o_ref[...] = (x_ref[...].astype(jnp.float32) - shift_ref[...]).astype(o_ref.dtype)


def _center(x3d, shift, tn, t_hw):
    N, C, HW = x3d.shape
    # NOTE: could add input_output_aliases={0: 0} when x is dead afterward to
    # save an HBM allocation; omitted since x may still be live at call sites.
    return pl.pallas_call(
        _center_kernel,
        out_shape=jax.ShapeDtypeStruct((N, C, HW), x3d.dtype),
        grid_spec=pltpu.PrefetchScalarGridSpec(
            num_scalar_prefetch=0,
            grid=(N // tn, HW // t_hw),
            in_specs=[
                pl.BlockSpec((tn, C, t_hw), lambda i, j: (i, 0, j)),
                pl.BlockSpec((1, C, 1), lambda i, j: (0, 0, 0)),
            ],
            out_specs=pl.BlockSpec((tn, C, t_hw), lambda i, j: (i, 0, j)),
        ),
        compiler_params=pltpu.CompilerParams(
            dimension_semantics=("parallel", "parallel"),
            vmem_limit_bytes=_VMEM_LIMIT_BYTES),
    )(x3d, shift)


# ----------------------------------------------------------------------------
# Lane-dense 2D path for inputs with no spatial dims (N, C): C on the lane
# axis instead of lane-width-1 blocks.
# ----------------------------------------------------------------------------
def _channel_sum2d_kernel(x_ref, sum_ref):
    s = jnp.sum(x_ref[...].astype(jnp.float32), axis=0, keepdims=True)  # (1, C)
    sum_ref[...] = s[None]                                              # (1, 1, C)


def _channel_sum2d(x2d, tn):
    N, C = x2d.shape
    return pl.pallas_call(
        _channel_sum2d_kernel,
        out_shape=jax.ShapeDtypeStruct((N // tn, 1, C), jnp.float32),
        grid_spec=pltpu.PrefetchScalarGridSpec(
            num_scalar_prefetch=0,
            grid=(N // tn,),
            in_specs=[pl.BlockSpec((tn, C), lambda i: (i, 0))],
            out_specs=pl.BlockSpec((1, 1, C), lambda i: (i, 0, 0)),
        ),
        compiler_params=pltpu.CompilerParams(
            dimension_semantics=("parallel",),
            vmem_limit_bytes=_VMEM_LIMIT_BYTES),
    )(x2d)


def _center2d_kernel(x_ref, shift_ref, o_ref):
    o_ref[...] = (x_ref[...].astype(jnp.float32) - shift_ref[...]).astype(o_ref.dtype)


def _center2d(x2d, shift, tn):
    N, C = x2d.shape
    return pl.pallas_call(
        _center2d_kernel,
        out_shape=jax.ShapeDtypeStruct((N, C), x2d.dtype),
        grid_spec=pltpu.PrefetchScalarGridSpec(
            num_scalar_prefetch=0,
            grid=(N // tn,),
            in_specs=[
                pl.BlockSpec((tn, C), lambda i: (i, 0)),
                pl.BlockSpec((1, C), lambda i: (0, 0)),
            ],
            out_specs=pl.BlockSpec((tn, C), lambda i: (i, 0)),
        ),
        compiler_params=pltpu.CompilerParams(
            dimension_semantics=("parallel",),
            vmem_limit_bytes=_VMEM_LIMIT_BYTES),
    )(x2d, shift)


@functools.partial(jax.jit, static_argnames=("training", "first", "momentum"))
def batch_centering_forward(x, bias, running_mean, *, training=True,
                            first=True, momentum=0.05):
    """Forward pass of BatchCentering on an (N, C, *spatial) input.

    Returns (y, new_running_mean).
    """
    N, C = x.shape[0], x.shape[1]
    HW = 1
    for s in x.shape[2:]:
        HW *= s
    itemsize = jnp.dtype(x.dtype).itemsize

    # Path selection: lane-dense 2D path for (N, C) inputs, generic (N, C, HW)
    # view otherwise (free contiguous reshape).
    tn2d = _pick_batch_tile_2d(N, C * itemsize, _TARGET_BLOCK_BYTES) if x.ndim == 2 else None
    use_2d = tn2d is not None

    if not use_2d:
        x_view = x.reshape(N, C, HW)
        t_hw = _pick_lane_tile(HW, C, itemsize, _TARGET_BLOCK_BYTES)
        tn = _pick_batch_tile(N, C * t_hw * itemsize, _TARGET_BLOCK_BYTES)
    else:
        x_view = x

    if training:
        if use_2d:
            partials = _channel_sum2d(x_view, tn2d)                        # (NB,1,C) f32
            batch_mean = jnp.sum(partials, axis=(0, 1)) / jnp.float32(N)   # (C,)
        else:
            partials = _channel_sum(x_view, tn, t_hw)                      # (NB,C,1) f32
            batch_mean = jnp.sum(partials, axis=(0, 2)) / jnp.float32(N * HW)
        if first:
            new_running_mean = batch_mean.astype(running_mean.dtype)
        else:
            new_running_mean = ((1.0 - momentum) * running_mean.astype(jnp.float32)
                                + momentum * batch_mean).astype(running_mean.dtype)
        mean = batch_mean
        # TODO(synk): torch.distributed all_reduce of running_mean (multi-host
        # sync) is not translated; this is a single-device kernel.
    else:
        mean = running_mean.astype(jnp.float32)
        new_running_mean = running_mean

    shift = mean if bias is None else mean - bias.astype(jnp.float32)
    if use_2d:
        y = _center2d(x_view, shift.reshape(1, C), tn2d)
    else:
        y = _center(x_view, shift.reshape(1, C, 1), tn, t_hw).reshape(x.shape)
    return y, new_running_mean


if __name__ == "__main__":
    key = jax.random.PRNGKey(0)
    kx, kb, k2 = jax.random.split(key, 3)

    N, C, H, W = 2, 4, 16, 16
    x = jax.random.normal(kx, (N, C, H, W), dtype=jnp.float32)
    bias = jax.random.normal(kb, (C,), dtype=jnp.float32) * 0.1
    running_mean = jnp.zeros((C,), dtype=jnp.float32)

    # Training, first step: running_mean <- batch mean.
    y, new_rm = batch_centering_forward(
        x, bias, running_mean, training=True, first=True, momentum=0.05)
    jax.block_until_ready((y, new_rm))

    ref_mean = x.mean(axis=(0, 2, 3))
    ref_y = x - ref_mean.reshape(1, C, 1, 1) + bias.reshape(1, C, 1, 1)
    assert y.shape == x.shape and y.dtype == x.dtype
    assert jnp.allclose(y, ref_y, atol=1e-5, rtol=1e-5)
    assert jnp.allclose(new_rm, ref_mean, atol=1e-5, rtol=1e-5)

    # Training, subsequent step: EMA update of the running mean.
    y_t2, rm_ema = batch_centering_forward(
        x, bias, new_rm, training=True, first=False, momentum=0.05)
    jax.block_until_ready((y_t2, rm_ema))
    ref_ema = (1.0 - 0.05) * new_rm + 0.05 * ref_mean
    assert jnp.allclose(y_t2, ref_y, atol=1e-5, rtol=1e-5)
    assert jnp.allclose(rm_ema, ref_ema, atol=1e-6, rtol=1e-6)

    # Eval mode: uses the running mean instead of batch stats.
    y_eval, rm_pass = batch_centering_forward(
        x, bias, new_rm, training=False, first=False, momentum=0.05)
    jax.block_until_ready(y_eval)
    ref_eval = x - new_rm.reshape(1, C, 1, 1) + bias.reshape(1, C, 1, 1)
    assert jnp.allclose(y_eval, ref_eval, atol=1e-5, rtol=1e-5)
    assert jnp.allclose(rm_pass, new_rm)

    # Ragged spatial extent (HW not a multiple of 128): full-lane-extent path.
    x2 = jax.random.normal(kx, (2, 3, 7, 7), dtype=jnp.float32)
    b2 = jnp.arange(3, dtype=jnp.float32) * 0.01
    y2, rm2 = batch_centering_forward(
        x2, b2, jnp.zeros((3,), jnp.float32), training=True, first=True)
    jax.block_until_ready((y2, rm2))
    ref_mean2 = x2.mean(axis=(0, 2, 3))
    ref_y2 = x2 - ref_mean2.reshape(1, 3, 1, 1) + b2.reshape(1, 3, 1, 1)
    assert jnp.allclose(y2, ref_y2, atol=1e-5, rtol=1e-5)
    assert jnp.allclose(rm2, ref_mean2, atol=1e-5, rtol=1e-5)

    # 2D input (no spatial dims): lane-dense (N, C) path.
    x_fc = jax.random.normal(k2, (8, 32), dtype=jnp.float32)
    b_fc = jax.random.normal(kb, (32,), dtype=jnp.float32) * 0.1
    y_fc, rm_fc = batch_centering_forward(
        x_fc, b_fc, jnp.zeros((32,), jnp.float32), training=True, first=True)
    jax.block_until_ready((y_fc, rm_fc))
    ref_mean_fc = x_fc.mean(axis=0)
    ref_y_fc = x_fc - ref_mean_fc.reshape(1, 32) + b_fc.reshape(1, 32)
    assert jnp.allclose(y_fc, ref_y_fc, atol=1e-5, rtol=1e-5)
    assert jnp.allclose(rm_fc, ref_mean_fc, atol=1e-5, rtol=1e-5)

    print("KERNEL_OK")
</pallas_src>

<mosaic_0001>
module attributes {stable_mosaic.version = 11 : i64} {
  func.func @_channel_sum_kernel(%arg0: i32, %arg1: i32, %arg2: memref<2x4x256xf32, #tpu.memory_space<vmem>>, %arg3: memref<1x4x1xf32, #tpu.memory_space<vmem>>) attributes {dimension_semantics = [#tpu.dimension_semantics<parallel>, #tpu.dimension_semantics<arbitrary>], iteration_bounds = array<i64: 1, 1>, scalar_prefetch = 0 : i64, scratch_operands = 0 : i64, tpu.core_type = #tpu.core_type<tc>, window_params = [{transform_indices = @transform_0, window_bounds = array<i64: 2, 4, 256>}, {transform_indices = @transform_1, window_bounds = array<i64: 1, 4, 1>}]} {
    %c0_i32 = arith.constant 0 : i32
    %0 = arith.cmpi eq, %arg1, %c0_i32 : i32
    %1 = arith.extui %0 : i1 to i32
    %c0_i32_0 = arith.constant 0 : i32
    %2 = arith.cmpi ne, %1, %c0_i32_0 : i32
    scf.if %2 {
      %cst_9 = arith.constant 0.000000e+00 : f32
      %9 = vector.broadcast %cst_9 : f32 to vector<1x4x1xf32>
      %c0_10 = arith.constant 0 : index
      %c0_11 = arith.constant 0 : index
      %c0_12 = arith.constant 0 : index
      %10 = vector.load %arg3[%c0_10, %c0_11, %c0_12] : memref<1x4x1xf32, #tpu.memory_space<vmem>>, vector<1x4x1xf32>
      tpu.vector_store %arg3[%c0_10, %c0_11, %c0_12], %9 {strides = array<i32>} : memref<1x4x1xf32, #tpu.memory_space<vmem>>, vector<1x4x1xf32>,
    } else {
    }
    %c0 = arith.constant 0 : index
    %c0_1 = arith.constant 0 : index
    %c0_2 = arith.constant 0 : index
    %3 = vector.load %arg3[%c0, %c0_1, %c0_2] : memref<1x4x1xf32, #tpu.memory_space<vmem>>, vector<1x4x1xf32>
    %c0_3 = arith.constant 0 : index
    %c0_4 = arith.constant 0 : index
    %c0_5 = arith.constant 0 : index
    %4 = vector.load %arg2[%c0_3, %c0_4, %c0_5] : memref<2x4x256xf32, #tpu.memory_space<vmem>>, vector<2x4x256xf32>
    %cst = arith.constant dense<0.000000e+00> : vector<4xf32>
    %5 = vector.multi_reduction <add>, %4, %cst [0, 2] : vector<2x4x256xf32> to vector<4xf32>
    %6 = vector.shape_cast %5 : vector<4xf32> to vector<1x4x1xf32>
    %7 = arith.addf %3, %6 : vector<1x4x1xf32>
    %c0_6 = arith.constant 0 : index
    %c0_7 = arith.constant 0 : index
    %c0_8 = arith.constant 0 : index
    %8 = vector.load %arg3[%c0_6, %c0_7, %c0_8] : memref<1x4x1xf32, #tpu.memory_space<vmem>>, vector<1x4x1xf32>
    tpu.vector_store %arg3[%c0_6, %c0_7, %c0_8], %7 {strides = array<i32>} : memref<1x4x1xf32, #tpu.memory_space<vmem>>, vector<1x4x1xf32>,
    return
  }
  func.func @transform_0(%arg0: i32, %arg1: i32) -> (i32, i32, i32) {
    %c0_i32 = arith.constant 0 : i32
    %c0_i32_0 = arith.constant 0 : i32
    return %arg0, %c0_i32, %arg1 : i32, i32, i32
  }
  func.func @transform_1(%arg0: i32, %arg1: i32) -> (i32, i32, i32) {
    %c0_i32 = arith.constant 0 : i32
    %c0_i32_0 = arith.constant 0 : i32
    %c0_i32_1 = arith.constant 0 : i32
    return %arg0, %c0_i32, %c0_i32_0 : i32, i32, i32
  }
}

module attributes {stable_mosaic.version = 11 : i64} {
  func.func @_center_kernel(%arg0: i32, %arg1: i32, %arg2: memref<2x4x256xf32, #tpu.memory_space<vmem>>, %arg3: memref<1x4x1xf32, #tpu.memory_space<vmem>>, %arg4: memref<2x4x256xf32, #tpu.memory_space<vmem>>) attributes {dimension_semantics = [#tpu.dimension_semantics<parallel>, #tpu.dimension_semantics<parallel>], iteration_bounds = array<i64: 1, 1>, scalar_prefetch = 0 : i64, scratch_operands = 0 : i64, tpu.core_type = #tpu.core_type<tc>, window_params = [{transform_indices = @transform_0, window_bounds = array<i64: 2, 4, 256>}, {pipeline_mode = #tpu.pipeline_mode<synchronous>, transform_indices = @transform_1, window_bounds = array<i64: 1, 4, 1>}, {transform_indices = @transform_2, window_bounds = array<i64: 2, 4, 256>}]} {
    %c0 = arith.constant 0 : index
    %c0_0 = arith.constant 0 : index
    %c0_1 = arith.constant 0 : index
    %0 = vector.load %arg2[%c0, %c0_0, %c0_1] : memref<2x4x256xf32, #tpu.memory_space<vmem>>, vector<2x4x256xf32>
    %c0_2 = arith.constant 0 : index
    %c0_3 = arith.constant 0 : index
    %c0_4 = arith.constant 0 : index
    %1 = vector.load %arg3[%c0_2, %c0_3, %c0_4] : memref<1x4x1xf32, #tpu.memory_space<vmem>>, vector<1x4x1xf32>
    %2 = vector.broadcast %1 : vector<1x4x1xf32> to vector<2x4x256xf32>
    %3 = arith.subf %0, %2 : vector<2x4x256xf32>
    %c0_5 = arith.constant 0 : index
    %c0_6 = arith.constant 0 : index
    %c0_7 = arith.constant 0 : index
    %4 = vector.load %arg4[%c0_5, %c0_6, %c0_7] : memref<2x4x256xf32, #tpu.memory_space<vmem>>, vector<2x4x256xf32>
    tpu.vector_store %arg4[%c0_5, %c0_6, %c0_7], %3 {strides = array<i32>} : memref<2x4x256xf32, #tpu.memory_space<vmem>>, vector<2x4x256xf32>,
    return
  }
  func.func @transform_0(%arg0: i32, %arg1: i32) -> (i32, i32, i32) {
    %c0_i32 = arith.constant 0 : i32
    %c0_i32_0 = arith.constant 0 : i32
    return %arg0, %c0_i32, %arg1 : i32, i32, i32
  }
  func.func @transform_1(%arg0: i32, %arg1: i32) -> (i32, i32, i32) {
    %c0_i32 = arith.constant 0 : i32
    %c0_i32_0 = arith.constant 0 : i32
    %c0_i32_1 = arith.constant 0 : i32
    %c0_i32_2 = arith.constant 0 : i32
    return %c0_i32, %c0_i32_0, %c0_i32_1 : i32, i32, i32
  }
  func.func @transform_2(%arg0: i32, %arg1: i32) -> (i32, i32, i32) {
    %c0_i32 = arith.constant 0 : i32
    %c0_i32_0 = arith.constant 0 : i32
    return %arg0, %c0_i32, %arg1 : i32, i32, i32
  }
}

</mosaic_0001>

<llo_original>
// kernel: batch_centering_forward.2
$region0: #{batch_centering_forward.2}
  #allocation0 [shape = 'u32[]', space=smem, size = 0x4, offset = 0x4, fixed_abs, tag = 'smem constant byte address 0x4 - core index']
  #allocation1 [shape = 'u32[144,128]{1,0:T(1,128)}', space=vmem, size = 0x12000, scoped, tag = 'internal scratch']
  %s0 = inlined_call_operand.vmem [shape: f32[2,4,256], index: 0, kind: input, shape index: {}]
  %s1 = inlined_call_operand.vmem [shape: f32[1,4,1], index: 1, kind: output, shape index: {}]
  %s2 = sld [smem:[#allocation0]]
  $region18: #{batch_centering_forward.2} parent=0
    _
  %s4 = ssub.s32 1, %s2
  %s5 = scalar_select 0, %s4, %s2
  // Predicated region
  $region2: #{batch_centering_forward.2} parent=0 // pred_check
    _
  $region3: #{batch_centering_forward.2} parent=0 // pred_check_branch
    %7 = sbr.rel (0) target = $region5
  $region4: #{batch_centering_forward.2} parent=0 // pred_region
    _
  $region5: #{batch_centering_forward.2} parent=0 // pred_fallthru
    _
  %p8 = scmp.eq.s32.totalorder 0, 0
  // Predicated region
  $region6: #{batch_centering_forward.2} parent=0 // pred_check
    %p9 = pneg %p8
  $region7: #{batch_centering_forward.2} parent=0 // pred_check_branch
    %11 = sbr.rel (%p9) target = $region9
  $region8: #{batch_centering_forward.2} parent=0 // pred_region
    %vm12 = vcmask 3072
    %13 = vst.msk [vmem:[%s1] sm:$0xf] %vm12, 0.0
  $region9: #{batch_centering_forward.2} parent=0 // pred_fallthru
    _
  %v14 = vld [vmem:[%s1] sm:$0xf]
  %v15 = vld [vmem:[%s0] sm:$0xff]
  %v16 = vld [vmem:[%s0 + $0x8] sm:$0xff]
  %v19 = vcombine.high %v15, %v15
  %v20 = vcombine.high %v16, %v16
  %vm23 = vcmask 1043456
  %v24 = vsel %vm23, %v15, 0.0
  %v25 = vsel %vm23, %v19, 0.0
  %v26 = vadd.f32 %v24, %v25
  %v27 = vsel %vm23, %v16, 0.0
  %v28 = vadd.f32 %v26, %v27
  %v29 = vsel %vm23, %v20, 0.0
  %v30 = vadd.f32 %v28, %v29
  %31 = vadd.xlane.f32.xlu0 %v30
  %v32 = vpop.xlane.xlu0 %31
  %v33 = vadd.f32 %v14, %v32
  %vm34 = vcmask 3072
  %35 = vst.msk [vmem:[%s1] sm:$0xf] %vm34, %v33
  // Predicated region
  $region10: #{batch_centering_forward.2} parent=0 // pred_check
    _
  $region11: #{batch_centering_forward.2} parent=0 // pred_check_branch
    %37 = sbr.rel (0) target = $region13
  $region12: #{batch_centering_forward.2} parent=0 // pred_region
    _
  $region13: #{batch_centering_forward.2} parent=0 // pred_fallthru
    _
  // Predicated region
  $region14: #{batch_centering_forward.2} parent=0 // pred_check
    _
  $region15: #{batch_centering_forward.2} parent=0 // pred_check_branch
    %39 = sbr.rel (0) target = $region17
  $region16: #{batch_centering_forward.2} parent=0 // pred_region
    _
  $region17: #{batch_centering_forward.2} parent=0 // pred_fallthru
    _

// kernel: batch_centering_forward.3
$region0: #{batch_centering_forward.3}
  #allocation0 [shape = 'u32[]', space=smem, size = 0x4, offset = 0x4, fixed_abs, tag = 'smem constant byte address 0x4 - core index']
  #allocation1 [shape = 'u32[144,128]{1,0:T(1,128)}', space=vmem, size = 0x12000, scoped, tag = 'internal scratch']
  %s0 = inlined_call_operand.vmem [shape: f32[2,4,256], index: 0, kind: input, shape index: {}]
  %s1 = inlined_call_operand.vmem [shape: f32[1,4,1], index: 1, kind: input, shape index: {}]
  %s2 = inlined_call_operand.vmem [shape: f32[2,4,256], index: 2, kind: output, shape index: {}]
  %s3 = sld [smem:[#allocation0]]
  $region18: #{batch_centering_forward.3} parent=0
    _
  %s5 = ssub.s32 1, %s3
  %s6 = scalar_select 0, %s5, %s3
  // Predicated region
  $region2: #{batch_centering_forward.3} parent=0 // pred_check
    _
  $region3: #{batch_centering_forward.3} parent=0 // pred_check_branch
    %8 = sbr.rel (0) target = $region5
  $region4: #{batch_centering_forward.3} parent=0 // pred_region
    _
  $region5: #{batch_centering_forward.3} parent=0 // pred_fallthru
    _
  // Predicated region
  $region6: #{batch_centering_forward.3} parent=0 // pred_check
    _
  $region7: #{batch_centering_forward.3} parent=0 // pred_check_branch
    %10 = sbr.rel (0) target = $region9
  $region8: #{batch_centering_forward.3} parent=0 // pred_region
    _
  $region9: #{batch_centering_forward.3} parent=0 // pred_fallthru
    _
  %v11 = vld [vmem:[%s0] sm:$0xff]
  %v12 = vld [vmem:[%s0 + $0x8] sm:$0xff]
  %v13 = vld [vmem:[%s1] sm:$0xf]
  %15 = vset.pattern.permute.xlu0 0
  %16 = vperm.xlu0 %15, %v13
  %v17 = vpop.permute.xlu0 %16
  %v19 = vunpack.c.l.s4 839922192
  %v20 = vunpack.c.0.s8 %v19
  %v21 = vlaneseq
  %v22 = vshrl.u32 %v21, 7
  %v23 = vsub.s32 %v20, %v22
  %v24 = vrot.slane %v17, %v23
  %v26 = vsub.f32 %v11, %v24
  %v27 = vsub.f32 %v12, %v24
  %28 = vst [vmem:[%s2] sm:$0xff] %v26
  %29 = vst [vmem:[%s2 + $0x8] sm:$0xff] %v27
  // Predicated region
  $region10: #{batch_centering_forward.3} parent=0 // pred_check
    _
  $region11: #{batch_centering_forward.3} parent=0 // pred_check_branch
    %31 = sbr.rel (0) target = $region13
  $region12: #{batch_centering_forward.3} parent=0 // pred_region
    _
  $region13: #{batch_centering_forward.3} parent=0 // pred_fallthru
    _
  // Predicated region
  $region14: #{batch_centering_forward.3} parent=0 // pred_check
    _
  $region15: #{batch_centering_forward.3} parent=0 // pred_check_branch
    %33 = sbr.rel (0) target = $region17
  $region16: #{batch_centering_forward.3} parent=0 // pred_region
    _
  $region17: #{batch_centering_forward.3} parent=0 // pred_fallthru
    _

</llo_original>
